<compile_context>
chip_gen: v7x
topology: tpu7x:2x2x1
jax: 0.10.0
libtpu: 0.0.40
codegen_flags: <defaults>
</compile_context>

<pallas_src>
import jax
import jax.numpy as jnp
from jax.experimental import pallas as pl
from jax.experimental.pallas import tpu as pltpu


def _round_up(n, m):
    return ((n + m - 1) // m) * m


def _tpu_kind():
    try:
        return jax.devices()[0].device_kind.lower()
    except Exception:
        return ""


def _block_rows_max(kind):
    # HBM-streaming kernel: make blocks as big as the scoped-VMEM default
    # comfortably allows (2 inputs x 2 pipeline buffers, f32 in VMEM).
    #   v6e / v7x: 32 MiB scoped default -> 8192 rows (16 MiB total)
    #   v5e / unknown: 16 MiB scoped default -> 4096 rows (8 MiB total)
    if "v6" in kind or "v7" in kind:
        return 8192
    return 4096


def _num_tensorcores(kind):
    # Chips where dimension_semantics=("parallel", ...) actually shards the
    # grid across TensorCores.  v5e / v6e are single-TC: a split axis there
    # only costs an over-covered duplicate block, so keep it off.
    if "v7" in kind or "v4" in kind or "v5p" in kind:
        return 2
    return 1


def reg_loss(inp, target):
    assert inp.shape == target.shape
    x = inp.reshape(-1)
    t = target.reshape(-1)
    n_elem = x.shape[0]

    if n_elem == 0:
        mask = (t > 0).astype(jnp.float32)
        return jnp.sum(jnp.abs(x * mask - t)) / jnp.sum(mask)

    # TODO(synk): when n_elem % 128 != 0 this jnp.pad still materializes a full
    # HBM copy of both inputs; a truly copy-free ragged path would need a 1-D
    # BlockSpec + in-kernel relayout, which is not worth the lowering risk.
    # Zero padding is numerically safe: target == 0 contributes 0 to both the
    # count and the abs-diff sum.
    pad = (-n_elem) % 128
    if pad:
        x = jnp.pad(x, (0, pad))
        t = jnp.pad(t, (0, pad))

    total_rows = (n_elem + pad) // 128
    x2 = x.reshape(total_rows, 128)   # contiguous reshape: no copy
    t2 = t.reshape(total_rows, 128)

    kind = _tpu_kind()
    block_rows = min(_block_rows_max(kind), _round_up(total_rows, 8))
    total_blocks = pl.cdiv(total_rows, block_rows)
    num_splits = 2 if (_num_tensorcores(kind) > 1 and total_blocks >= 2) else 1
    bps = pl.cdiv(total_blocks, num_splits)         # blocks per split
    needs_clamp = num_splits * bps > total_blocks   # grid over-covers blocks
    needs_mask = num_splits * bps * block_rows != total_rows

    # Accumulator height: more rows => more independent VALU add chains
    # (breaks the serial dependence of a block_rows-deep fold).
    for acc_rows in (32, 16, 8):
        if block_rows % acc_rows == 0:
            break

    def in_map(c, b):
        blk = c * bps + b
        if needs_clamp:
            # Over-covered steps re-read the last valid block; their logical
            # rows are >= total_rows so the in-kernel mask zeroes them out.
            blk = jnp.minimum(blk, total_blocks - 1)
        return (blk, 0)

    def kernel(x_ref, t_ref, sum_ref, cnt_ref):
        c = pl.program_id(0)
        b = pl.program_id(1)

        @pl.when(b == 0)
        def _():
            sum_ref[...] = jnp.zeros_like(sum_ref)
            cnt_ref[...] = jnp.zeros_like(cnt_ref)

        xb = x_ref[...].astype(jnp.float32)
        tb = t_ref[...].astype(jnp.float32)

        def accumulate(tvals):
            # Predicate reuse: no float mask, no x*mask multiply.
            #   target > 0  -> |x - t| ;  target <= 0 -> |t|
            pred = tvals > 0.0
            diff = jnp.abs(jnp.where(pred, xb - tvals, tvals))
            ones = jnp.where(pred, 1.0, 0.0)
            sum_ref[...] += jnp.sum(
                diff.reshape(block_rows // acc_rows, acc_rows, 128), axis=0)
            cnt_ref[...] += jnp.sum(
                ones.reshape(block_rows // acc_rows, acc_rows, 128), axis=0)

        if needs_mask:
            blk = c * bps + b                       # un-clamped logical index
            is_edge = (blk + 1) * block_rows > total_rows

            @pl.when(jnp.logical_not(is_edge))
            def _():
                accumulate(tb)                      # lean hot path

            @pl.when(is_edge)
            def _():
                rows = blk * block_rows + jax.lax.broadcasted_iota(
                    jnp.int32, (block_rows, 128), 0)
                # Zeroing target alone is enough: target == 0 contributes 0 to
                # both count and abs-diff (garbage x is never selected).
                accumulate(jnp.where(rows < total_rows, tb, 0.0))
        else:
            accumulate(tb)

    out_sum, out_cnt = pl.pallas_call(
        kernel,
        out_shape=(
            jax.ShapeDtypeStruct((num_splits, acc_rows, 128), jnp.float32),
            jax.ShapeDtypeStruct((num_splits, acc_rows, 128), jnp.float32),
        ),
        grid_spec=pltpu.PrefetchScalarGridSpec(
            num_scalar_prefetch=0,
            grid=(num_splits, bps),
            in_specs=[
                pl.BlockSpec((block_rows, 128), in_map),
                pl.BlockSpec((block_rows, 128), in_map),
            ],
            out_specs=[
                pl.BlockSpec((None, acc_rows, 128), lambda c, b: (c, 0, 0)),
                pl.BlockSpec((None, acc_rows, 128), lambda c, b: (c, 0, 0)),
            ],
        ),
        compiler_params=pltpu.CompilerParams(
            dimension_semantics=("parallel", "arbitrary"),
        ),
    )(x2, t2)

    # Tiny final combine + divide.  Matches PyTorch exactly: divides by n with
    # no epsilon, so n == 0 yields inf/nan just like the reference module.
    return jnp.sum(out_sum) / jnp.sum(out_cnt)


def _reg_loss_ref(inp, target):
    mask = (target > 0).astype(jnp.float32)
    n = jnp.sum(mask)
    return jnp.sum(jnp.abs(inp * mask - target)) / n


if __name__ == "__main__":
    key = jax.random.PRNGKey(0)
    k1, k2 = jax.random.split(key)
    # Small NCHW shapes, consistent with a detection-style regression head.
    inp = jax.random.normal(k1, (2, 4, 16, 16), dtype=jnp.float32)
    tgt = jax.random.normal(k2, (2, 4, 16, 16), dtype=jnp.float32)

    loss = reg_loss(inp, tgt)
    jax.block_until_ready(loss)

    ref = _reg_loss_ref(inp, tgt)
    assert jnp.allclose(loss, ref, rtol=1e-5, atol=1e-5), (loss, ref)
    print("KERNEL_OK")
</pallas_src>

<mosaic_0001>
module attributes {stable_mosaic.version = 11 : i64} {
  func.func @kernel(%arg0: i32, %arg1: i32, %arg2: memref<16x128xf32, #tpu.memory_space<vmem>>, %arg3: memref<16x128xf32, #tpu.memory_space<vmem>>, %arg4: memref<1x16x128xf32, #tpu.memory_space<vmem>>, %arg5: memref<1x16x128xf32, #tpu.memory_space<vmem>>) attributes {dimension_semantics = [#tpu.dimension_semantics<parallel>, #tpu.dimension_semantics<arbitrary>], iteration_bounds = array<i64: 1, 1>, scalar_prefetch = 0 : i64, scratch_operands = 0 : i64, tpu.core_type = #tpu.core_type<tc>, window_params = [{transform_indices = @transform_0, window_bounds = array<i64: 16, 128>}, {transform_indices = @transform_1, window_bounds = array<i64: 16, 128>}, {transform_indices = @transform_2, window_bounds = array<i64: 1, 16, 128>}, {transform_indices = @transform_3, window_bounds = array<i64: 1, 16, 128>}]} {
    %c0_i32 = arith.constant 0 : i32
    %0 = arith.cmpi eq, %arg1, %c0_i32 : i32
    %1 = arith.extui %0 : i1 to i32
    %c0_i32_0 = arith.constant 0 : i32
    %2 = arith.cmpi ne, %1, %c0_i32_0 : i32
    scf.if %2 {
      %cst_20 = arith.constant 0.000000e+00 : f32
      %29 = vector.broadcast %cst_20 : f32 to vector<16x128xf32>
      %c0_21 = arith.constant 0 : index
      %c0_22 = arith.constant 0 : index
      %c0_23 = arith.constant 0 : index
      %30 = vector.load %arg4[%c0_21, %c0_22, %c0_23] : memref<1x16x128xf32, #tpu.memory_space<vmem>>, vector<1x16x128xf32>
      %31 = vector.shape_cast %30 : vector<1x16x128xf32> to vector<16x128xf32>
      %32 = vector.shape_cast %29 : vector<16x128xf32> to vector<1x16x128xf32>
      tpu.vector_store %arg4[%c0_21, %c0_22, %c0_23], %32 {strides = array<i32>} : memref<1x16x128xf32, #tpu.memory_space<vmem>>, vector<1x16x128xf32>,
      %cst_24 = arith.constant 0.000000e+00 : f32
      %33 = vector.broadcast %cst_24 : f32 to vector<16x128xf32>
      %c0_25 = arith.constant 0 : index
      %c0_26 = arith.constant 0 : index
      %c0_27 = arith.constant 0 : index
      %34 = vector.load %arg5[%c0_25, %c0_26, %c0_27] : memref<1x16x128xf32, #tpu.memory_space<vmem>>, vector<1x16x128xf32>
      %35 = vector.shape_cast %34 : vector<1x16x128xf32> to vector<16x128xf32>
      %36 = vector.shape_cast %33 : vector<16x128xf32> to vector<1x16x128xf32>
      tpu.vector_store %arg5[%c0_25, %c0_26, %c0_27], %36 {strides = array<i32>} : memref<1x16x128xf32, #tpu.memory_space<vmem>>, vector<1x16x128xf32>,
    } else {
    }
    %c0 = arith.constant 0 : index
    %c0_1 = arith.constant 0 : index
    %3 = vector.load %arg2[%c0, %c0_1] : memref<16x128xf32, #tpu.memory_space<vmem>>, vector<16x128xf32>
    %c0_2 = arith.constant 0 : index
    %c0_3 = arith.constant 0 : index
    %4 = vector.load %arg3[%c0_2, %c0_3] : memref<16x128xf32, #tpu.memory_space<vmem>>, vector<16x128xf32>
    %cst = arith.constant 0.000000e+00 : f32
    %5 = vector.broadcast %cst : f32 to vector<16x128xf32>
    %6 = arith.cmpf ogt, %4, %5 : vector<16x128xf32>
    %7 = arith.subf %3, %4 : vector<16x128xf32>
    %8 = arith.select %6, %7, %4 : vector<16x128xi1>, vector<16x128xf32>
    %9 = math.absf %8 : vector<16x128xf32>
    %cst_4 = arith.constant 1.000000e+00 : f32
    %cst_5 = arith.constant 0.000000e+00 : f32
    %10 = vector.broadcast %cst_4 : f32 to vector<16x128xf32>
    %11 = vector.broadcast %cst_5 : f32 to vector<16x128xf32>
    %12 = arith.select %6, %10, %11 : vector<16x128xi1>, vector<16x128xf32>
    %c0_6 = arith.constant 0 : index
    %c0_7 = arith.constant 0 : index
    %c0_8 = arith.constant 0 : index
    %13 = vector.load %arg4[%c0_6, %c0_7, %c0_8] : memref<1x16x128xf32, #tpu.memory_space<vmem>>, vector<1x16x128xf32>
    %14 = vector.shape_cast %13 : vector<1x16x128xf32> to vector<16x128xf32>
    %15 = vector.shape_cast %9 : vector<16x128xf32> to vector<1x16x128xf32>
    %cst_9 = arith.constant dense<0.000000e+00> : vector<16x128xf32>
    %16 = vector.multi_reduction <add>, %15, %cst_9 [0] : vector<1x16x128xf32> to vector<16x128xf32>
    %17 = arith.addf %14, %16 : vector<16x128xf32>
    %c0_10 = arith.constant 0 : index
    %c0_11 = arith.constant 0 : index
    %c0_12 = arith.constant 0 : index
    %18 = vector.load %arg4[%c0_10, %c0_11, %c0_12] : memref<1x16x128xf32, #tpu.memory_space<vmem>>, vector<1x16x128xf32>
    %19 = vector.shape_cast %18 : vector<1x16x128xf32> to vector<16x128xf32>
    %20 = vector.shape_cast %17 : vector<16x128xf32> to vector<1x16x128xf32>
    tpu.vector_store %arg4[%c0_10, %c0_11, %c0_12], %20 {strides = array<i32>} : memref<1x16x128xf32, #tpu.memory_space<vmem>>, vector<1x16x128xf32>,
    %c0_13 = arith.constant 0 : index
    %c0_14 = arith.constant 0 : index
    %c0_15 = arith.constant 0 : index
    %21 = vector.load %arg5[%c0_13, %c0_14, %c0_15] : memref<1x16x128xf32, #tpu.memory_space<vmem>>, vector<1x16x128xf32>
    %22 = vector.shape_cast %21 : vector<1x16x128xf32> to vector<16x128xf32>
    %23 = vector.shape_cast %12 : vector<16x128xf32> to vector<1x16x128xf32>
    %cst_16 = arith.constant dense<0.000000e+00> : vector<16x128xf32>
    %24 = vector.multi_reduction <add>, %23, %cst_16 [0] : vector<1x16x128xf32> to vector<16x128xf32>
    %25 = arith.addf %22, %24 : vector<16x128xf32>
    %c0_17 = arith.constant 0 : index
    %c0_18 = arith.constant 0 : index
    %c0_19 = arith.constant 0 : index
    %26 = vector.load %arg5[%c0_17, %c0_18, %c0_19] : memref<1x16x128xf32, #tpu.memory_space<vmem>>, vector<1x16x128xf32>
    %27 = vector.shape_cast %26 : vector<1x16x128xf32> to vector<16x128xf32>
    %28 = vector.shape_cast %25 : vector<16x128xf32> to vector<1x16x128xf32>
    tpu.vector_store %arg5[%c0_17, %c0_18, %c0_19], %28 {strides = array<i32>} : memref<1x16x128xf32, #tpu.memory_space<vmem>>, vector<1x16x128xf32>,
    return
  }
  func.func @transform_0(%arg0: i32, %arg1: i32) -> (i32, i32) {
    %c1_i32 = arith.constant 1 : i32
    %0 = arith.muli %arg0, %c1_i32 : i32
    %1 = arith.addi %0, %arg1 : i32
    %c0_i32 = arith.constant 0 : i32
    %c0_i32_0 = arith.constant 0 : i32
    return %1, %c0_i32 : i32, i32
  }
  func.func @transform_1(%arg0: i32, %arg1: i32) -> (i32, i32) {
    %c1_i32 = arith.constant 1 : i32
    %0 = arith.muli %arg0, %c1_i32 : i32
    %1 = arith.addi %0, %arg1 : i32
    %c0_i32 = arith.constant 0 : i32
    %c0_i32_0 = arith.constant 0 : i32
    return %1, %c0_i32 : i32, i32
  }
  func.func @transform_2(%arg0: i32, %arg1: i32) -> (i32, i32, i32) {
    %c0_i32 = arith.constant 0 : i32
    %c0_i32_0 = arith.constant 0 : i32
    %c0_i32_1 = arith.constant 0 : i32
    return %arg0, %c0_i32, %c0_i32_0 : i32, i32, i32
  }
  func.func @transform_3(%arg0: i32, %arg1: i32) -> (i32, i32, i32) {
    %c0_i32 = arith.constant 0 : i32
    %c0_i32_0 = arith.constant 0 : i32
    %c0_i32_1 = arith.constant 0 : i32
    return %arg0, %c0_i32, %c0_i32_0 : i32, i32, i32
  }
}

</mosaic_0001>

<llo_original>
// kernel: tpu_custom_call.1
$region0: #{tpu_custom_call.1}
  #allocation0 [shape = 'u32[]', space=smem, size = 0x4, offset = 0x4, fixed_abs, tag = 'smem constant byte address 0x4 - core index']
  #allocation1 [shape = 'u32[144,128]{1,0:T(1,128)}', space=vmem, size = 0x12000, scoped, tag = 'internal scratch']
  %s0 = inlined_call_operand.hbm [shape: f32[16,128], index: 0, kind: input, shape index: {}]
  %s1 = inlined_call_operand.hbm [shape: f32[16,128], index: 1, kind: input, shape index: {}]
  %s2 = inlined_call_operand.hbm [shape: f32[1,16,128], index: 2, kind: output, shape index: {0}]
  %s3 = inlined_call_operand.hbm [shape: f32[1,16,128], index: 3, kind: output, shape index: {1}]
  %4 = xla_tuple %s2, %s3
  %s5 = sld [smem:[#allocation0]]
  $region38: #{tpu_custom_call.1} parent=0
    _
  %s7 = ssub.s32 1, %s5
  %s8 = scalar_select 0, %s7, %s5
  $region1: #{tpu_custom_call.1} parent=0
    #allocation2 [shape = 'u8[8192]{0}', space=vmem, size = 0x2000, scoped, tag = 'input window, operand 0, single buffered']
    #allocation3 [shape = 's32[1]{0}', space=sflag, size = 0x4, scoped, tag = 'scoped memory for tpu_custom_call.1']
    #allocation4 [shape = 's32[1]{0}', space=sflag, size = 0x4, scoped, tag = 'scoped memory for tpu_custom_call.1']
    #allocation5 [shape = 'u8[8192]{0}', space=vmem, size = 0x2000, scoped, tag = 'input window, operand 1, single buffered']
    #allocation6 [shape = 's32[1]{0}', space=sflag, size = 0x4, scoped, tag = 'scoped memory for tpu_custom_call.1']
    #allocation7 [shape = 'u8[8192]{0}', space=vmem, size = 0x2000, scoped, tag = 'output window, operand 0, single buffered']
    #allocation8 [shape = 'u8[8192]{0}', space=vmem, size = 0x2000, scoped, tag = 'output window, operand 1, single buffered']
    #allocation9 [shape = 's32[1]{0}', space=sflag, size = 0x4, scoped, tag = 'scoped memory for tpu_custom_call.1']
    %9 = vsyncpa [#allocation3], 0
    %10 = vsyncpa [#allocation6], 0
    %11 = vsyncpa [#allocation4], 0
    %12 = vsyncpa [#allocation9], 0
    // Predicated region
    $region2: #{tpu_custom_call.1} parent=1 // pred_check
      _
    $region3: #{tpu_custom_call.1} parent=1 // pred_check_branch
      %14 = sbr.rel (0) target = $region5
    $region4: #{tpu_custom_call.1} parent=1 // pred_region
      %s15 = sadd.s32 0, 0
      %s16 = smul.u32 2, %s15
      %s18 = ssub.s32 256, 256
      %19 = vsyncadd [#allocation3], %s18
      %s20 = smul.addr %s16, 128
      %s21 = scalar_lea.hbm %s0, %s20
      %s22 = sshll.u32 [#allocation2], 4
      %s23 = int_to_ptr.vmem [resolvable:$true] %s22
      %28 = dma.hbm_to_vmem [thread:$0]  %s21, 256, %s23, [#allocation3], 128, 128, 8
    $region5: #{tpu_custom_call.1} parent=1 // pred_fallthru
      _
    // Predicated region
    $region6: #{tpu_custom_call.1} parent=1 // pred_check
      _
    $region7: #{tpu_custom_call.1} parent=1 // pred_check_branch
      %30 = sbr.rel (0) target = $region9
    $region8: #{tpu_custom_call.1} parent=1 // pred_region
      %s31 = sadd.s32 0, 0
      %s32 = smul.u32 2, %s31
      %s34 = ssub.s32 256, 256
      %35 = vsyncadd [#allocation6], %s34
      %s36 = smul.addr %s32, 128
      %s37 = scalar_lea.hbm %s1, %s36
      %s38 = sshll.u32 [#allocation5], 4
      %s39 = int_to_ptr.vmem [resolvable:$true] %s38
      %44 = dma.hbm_to_vmem [thread:$0]  %s37, 256, %s39, [#allocation6], 128, 128, 8
    $region9: #{tpu_custom_call.1} parent=1 // pred_fallthru
      _
    // Predicated region
    $region10: #{tpu_custom_call.1} parent=1 // pred_check
      _
    $region11: #{tpu_custom_call.1} parent=1 // pred_check_branch
      %46 = sbr.rel (0) target = $region13
    $region12: #{tpu_custom_call.1} parent=1 // pred_region
      %47 = dma.done [#allocation3], 256
    $region13: #{tpu_custom_call.1} parent=1 // pred_fallthru
      _
    // Predicated region
    $region14: #{tpu_custom_call.1} parent=1 // pred_check
      _
    $region15: #{tpu_custom_call.1} parent=1 // pred_check_branch
      %49 = sbr.rel (0) target = $region17
    $region16: #{tpu_custom_call.1} parent=1 // pred_region
      %50 = dma.done [#allocation6], 256
    $region17: #{tpu_custom_call.1} parent=1 // pred_fallthru
      _
    %s51 = sadd.s32 0, 0
    %s52 = smul.u32 2, %s51
    %s53 = sadd.s32 0, 0
    %s54 = smul.u32 2, %s53
    %p55 = scmp.eq.s32.totalorder 0, 0
    // Predicated region
    $region18: #{tpu_custom_call.1} parent=1 // pred_check
      %p56 = pneg %p55
    $region19: #{tpu_custom_call.1} parent=1 // pred_check_branch
      %58 = sbr.rel (%p56) target = $region21
    $region20: #{tpu_custom_call.1} parent=1 // pred_region
      %59 = vst [vmem:[#allocation7] sm:$0xff] 0.0
      %60 = vst [vmem:[#allocation7 + $0x8] sm:$0xff] 0.0
      %61 = vst [vmem:[#allocation8] sm:$0xff] 0.0
      %62 = vst [vmem:[#allocation8 + $0x8] sm:$0xff] 0.0
    $region21: #{tpu_custom_call.1} parent=1 // pred_fallthru
      _
    %v63 = vld [vmem:[#allocation2] sm:$0xff]
    %v64 = vld [vmem:[#allocation2 + $0x8] sm:$0xff]
    %v65 = vld [vmem:[#allocation5] sm:$0xff]
    %v66 = vld [vmem:[#allocation5 + $0x8] sm:$0xff]
    %vm67 = vcmp.gt.f32.partialorder %v65, 0.0
    %vm68 = vcmp.gt.f32.partialorder %v66, 0.0
    %v69 = vsub.f32 %v63, %v65
    %v70 = vsub.f32 %v64, %v66
    %v71 = vsel %vm67, %v69, %v65
    %v72 = vsel %vm68, %v70, %v66
    %v73 = vand.u32 2147483647, %v71
    %v74 = vand.u32 2147483647, %v72
    %v75 = vsel %vm67, 1.0, 0.0
    %v76 = vsel %vm68, 1.0, 0.0
    %v77 = vld [vmem:[#allocation7] sm:$0xff]
    %v78 = vld [vmem:[#allocation7 + $0x8] sm:$0xff]
    %v79 = vadd.f32 %v73, 0.0
    %v80 = vadd.f32 %v74, 0.0
    %v81 = vadd.f32 %v77, %v79
    %v82 = vadd.f32 %v78, %v80
    %83 = vst [vmem:[#allocation7] sm:$0xff] %v81
    %84 = vst [vmem:[#allocation7 + $0x8] sm:$0xff] %v82
    %v85 = vld [vmem:[#allocation8] sm:$0xff]
    %v86 = vld [vmem:[#allocation8 + $0x8] sm:$0xff]
    %v87 = vadd.f32 %v75, 0.0
    %v88 = vadd.f32 %v76, 0.0
    %v89 = vadd.f32 %v85, %v87
    %v90 = vadd.f32 %v86, %v88
    %91 = vst [vmem:[#allocation8] sm:$0xff] %v89
    %92 = vst [vmem:[#allocation8 + $0x8] sm:$0xff] %v90
    // Predicated region
    $region22: #{tpu_custom_call.1} parent=1 // pred_check
      _
    $region23: #{tpu_custom_call.1} parent=1 // pred_check_branch
      %94 = sbr.rel (0) target = $region25
    $region24: #{tpu_custom_call.1} parent=1 // pred_region
      %s96 = ssub.s32 256, 256
      %97 = vsyncadd [#allocation4], %s96
      %s98 = sshll.u32 [#allocation7], 4
      %s99 = int_to_ptr.vmem [resolvable:$true] %s98
      %104 = dma.vmem_to_hbm [thread:$0]  %s99, 256, %s2, [#allocation4], 128, 128, 8
    $region25: #{tpu_custom_call.1} parent=1 // pred_fallthru
      _
    // Predicated region
    $region26: #{tpu_custom_call.1} parent=1 // pred_check
      _
    $region27: #{tpu_custom_call.1} parent=1 // pred_check_branch
      %106 = sbr.rel (0) target = $region29
    $region28: #{tpu_custom_call.1} parent=1 // pred_region
      %s108 = ssub.s32 256, 256
      %109 = vsyncadd [#allocation9], %s108
      %s110 = sshll.u32 [#allocation8], 4
      %s111 = int_to_ptr.vmem [resolvable:$true] %s110
      %116 = dma.vmem_to_hbm [thread:$0]  %s111, 256, %s3, [#allocation9], 128, 128, 8
    $region29: #{tpu_custom_call.1} parent=1 // pred_fallthru
      _
    // Predicated region
    $region30: #{tpu_custom_call.1} parent=1 // pred_check
      _
    $region31: #{tpu_custom_call.1} parent=1 // pred_check_branch
      %118 = sbr.rel (0) target = $region33
    $region32: #{tpu_custom_call.1} parent=1 // pred_region
      %119 = dma.done [#allocation4], 256
    $region33: #{tpu_custom_call.1} parent=1 // pred_fallthru
      _
    // Predicated region
    $region34: #{tpu_custom_call.1} parent=1 // pred_check
      _
    $region35: #{tpu_custom_call.1} parent=1 // pred_check_branch
      %121 = sbr.rel (0) target = $region37
    $region36: #{tpu_custom_call.1} parent=1 // pred_region
      %122 = dma.done [#allocation9], 256
    $region37: #{tpu_custom_call.1} parent=1 // pred_fallthru
      _
    %123 = vsyncpa [#allocation3], 1
    %124 = vsyncpa [#allocation6], 1
    %125 = vsyncpa [#allocation4], 1
    %126 = vsyncpa [#allocation9], 1

</llo_original>
